<compile_context>
chip_gen: v5e
topology: v5e:2x2
jax: 0.10.0
libtpu: 0.0.40
codegen_flags: <defaults>
</compile_context>

<pallas_src>
import functools

import jax
import jax.numpy as jnp
from jax.experimental import pallas as pl
from jax.experimental.pallas import tpu as pltpu


def _round_up(v, m):
    return ((v + m - 1) // m) * m


def _encoder_kernel(x_ref, w1_ref, b1_ref, wh_ref, bh_ref, out_ref):
    # fc1 + ReLU  (MXU matmul with f32 accumulation; bias/ReLU stay f32 on the VPU)
    h = jnp.dot(x_ref[...], w1_ref[...], preferred_element_type=jnp.float32)
    h = jnp.maximum(h + b1_ref[...], 0.0)
    # fused mu|logvar head: one wide, lane-dense matmul + bias, one wide store
    y = jnp.dot(h, wh_ref[...], preferred_element_type=jnp.float32)
    out_ref[...] = (y + bh_ref[...]).astype(out_ref.dtype)


def init_encoder_params(key, input_dim, hidden_dim, z_dim):
    """Deterministic init mimicking nn.Linear's U(-1/sqrt(fan_in), 1/sqrt(fan_in)).

    Weights are stored transposed vs PyTorch, i.e. [in, out]; biases are [1, out].
    """
    ks = jax.random.split(key, 6)

    def lin(kw, kb, fan_in, fan_out):
        bound = 1.0 / jnp.sqrt(jnp.float32(fan_in))
        w = jax.random.uniform(kw, (fan_in, fan_out), jnp.float32, -bound, bound)
        b = jax.random.uniform(kb, (1, fan_out), jnp.float32, -bound, bound)
        return w, b

    w1, b1 = lin(ks[0], ks[1], input_dim, hidden_dim)
    wmu, bmu = lin(ks[2], ks[3], hidden_dim, z_dim)
    wlv, blv = lin(ks[4], ks[5], hidden_dim, z_dim)
    return (w1, b1, wmu, bmu, wlv, blv)


def pack_encoder_params(params, input_dim, hidden_dim, z_dim):
    """Fuse the mu/logvar heads and zero-pad dims to MXU/lane-friendly sizes.

    Done ONCE outside the per-step call.  Zero-padding is semantics-preserving:
    padded x columns are zero, padded b1 lanes are zero -> padded h lanes are
    relu(0)=0 -> padded W_heads rows contribute nothing, padded output lanes are
    zero and are sliced off in the wrapper.
    """
    w1, b1, wmu, bmu, wlv, blv = params
    in_p = _round_up(input_dim, 128)
    hid_p = _round_up(hidden_dim, 128)
    head_p = _round_up(2 * z_dim, 128)

    w1_p = jnp.zeros((in_p, hid_p), jnp.float32).at[:input_dim, :hidden_dim].set(w1)
    b1_p = jnp.zeros((1, hid_p), jnp.float32).at[:, :hidden_dim].set(b1)

    wh = jnp.concatenate([wmu, wlv], axis=1)   # [hidden, 2*z_dim]
    bh = jnp.concatenate([bmu, blv], axis=1)   # [1, 2*z_dim]
    wh_p = jnp.zeros((hid_p, head_p), jnp.float32).at[:hidden_dim, :2 * z_dim].set(wh)
    bh_p = jnp.zeros((1, head_p), jnp.float32).at[:, :2 * z_dim].set(bh)

    return (w1_p, b1_p, wh_p, bh_p)


@functools.partial(jax.jit, static_argnames=("z_dim", "tm"))
def encoder_forward(x, packed_params, z_dim, tm=256):
    """x: [B, input_dim] f32 -> (mu [B, z_dim], logvar [B, z_dim])."""
    w1, b1, wh, bh = packed_params
    B, input_dim = x.shape
    in_p, hid_p = w1.shape
    head_p = wh.shape[1]

    # Batch tile: TM rows per grid step.  tm=256 keeps well under the scoped
    # VMEM limit on every generation (incl. v7x's 64 MiB/TC); weights stay
    # resident across steps via constant index_maps.
    TM = tm if B >= tm else _round_up(max(B, 1), 8)
    B_pad = _round_up(B, TM)

    # Pad x to [B_pad, in_p]; padded rows/cols are zero and sliced off below.
    x_p = jnp.zeros((B_pad, in_p), jnp.float32).at[:B, :input_dim].set(x)

    grid = (B_pad // TM,)

    flops = 2 * B_pad * (in_p * hid_p + hid_p * head_p)
    bytes_accessed = 4 * (B_pad * in_p + in_p * hid_p + hid_p
                          + hid_p * head_p + head_p + B_pad * head_p)

    out = pl.pallas_call(
        _encoder_kernel,
        out_shape=jax.ShapeDtypeStruct((B_pad, head_p), jnp.float32),
        grid=grid,
        in_specs=[
            pl.BlockSpec((TM, in_p), lambda i: (i, 0)),       # x tile (pipelined)
            pl.BlockSpec((in_p, hid_p), lambda i: (0, 0)),    # W1 (VMEM-resident)
            pl.BlockSpec((1, hid_p), lambda i: (0, 0)),       # b1
            pl.BlockSpec((hid_p, head_p), lambda i: (0, 0)),  # fused head weights
            pl.BlockSpec((1, head_p), lambda i: (0, 0)),      # fused head bias
        ],
        out_specs=pl.BlockSpec((TM, head_p), lambda i: (i, 0)),
        compiler_params=pltpu.CompilerParams(
            dimension_semantics=("parallel",),                # megacore on v7x
        ),
        cost_estimate=pl.CostEstimate(
            flops=flops, transcendentals=0, bytes_accessed=bytes_accessed),
    )(x_p, w1, b1, wh, bh)

    mu = out[:B, :z_dim]
    logvar = out[:B, z_dim:2 * z_dim]
    return mu, logvar


def encoder_reference(x, params):
    """Pure-JAX reference (unpadded, unfused) for correctness checking."""
    w1, b1, wmu, bmu, wlv, blv = params
    h = jnp.maximum(x @ w1 + b1, 0.0)
    return h @ wmu + bmu, h @ wlv + blv


if __name__ == "__main__":
    # Small shapes consistent with the module's forward.
    batch, input_dim, hidden_dim, z_dim = 8, 64, 32, 16

    key = jax.random.PRNGKey(0)
    k_x, k_p = jax.random.split(key)

    x = jax.random.normal(k_x, (batch, input_dim), dtype=jnp.float32)
    params = init_encoder_params(k_p, input_dim, hidden_dim, z_dim)

    # One-time fuse + pad (not per call).
    packed = pack_encoder_params(params, input_dim, hidden_dim, z_dim)

    mu, logvar = encoder_forward(x, packed, z_dim)
    jax.block_until_ready((mu, logvar))

    mu_ref, logvar_ref = encoder_reference(x, params)
    assert mu.shape == (batch, z_dim) and logvar.shape == (batch, z_dim)
    assert jnp.allclose(mu, mu_ref, atol=1e-4, rtol=1e-5)
    assert jnp.allclose(logvar, logvar_ref, atol=1e-4, rtol=1e-5)

    print("KERNEL_OK")
</pallas_src>

<mosaic_0001>
module attributes {stable_mosaic.version = 11 : i64} {
  func.func @_encoder_kernel(%arg0: i32, %arg1: memref<8x128xf32, #tpu.memory_space<vmem>>, %arg2: memref<128x128xf32, #tpu.memory_space<vmem>>, %arg3: memref<1x128xf32, #tpu.memory_space<vmem>>, %arg4: memref<128x128xf32, #tpu.memory_space<vmem>>, %arg5: memref<1x128xf32, #tpu.memory_space<vmem>>, %arg6: memref<8x128xf32, #tpu.memory_space<vmem>>) attributes {dimension_semantics = [#tpu.dimension_semantics<parallel>], iteration_bounds = array<i64: 1>, scalar_prefetch = 0 : i64, scratch_operands = 0 : i64, tpu.core_type = #tpu.core_type<tc>, window_params = [{transform_indices = @transform_0, window_bounds = array<i64: 8, 128>}, {pipeline_mode = #tpu.pipeline_mode<synchronous>, transform_indices = @transform_1, window_bounds = array<i64: 128, 128>}, {pipeline_mode = #tpu.pipeline_mode<synchronous>, transform_indices = @transform_2, window_bounds = array<i64: 1, 128>}, {pipeline_mode = #tpu.pipeline_mode<synchronous>, transform_indices = @transform_3, window_bounds = array<i64: 128, 128>}, {pipeline_mode = #tpu.pipeline_mode<synchronous>, transform_indices = @transform_4, window_bounds = array<i64: 1, 128>}, {transform_indices = @transform_5, window_bounds = array<i64: 8, 128>}]} {
    %c0 = arith.constant 0 : index
    %c0_0 = arith.constant 0 : index
    %0 = vector.load %arg1[%c0, %c0_0] : memref<8x128xf32, #tpu.memory_space<vmem>>, vector<8x128xf32>
    %c0_1 = arith.constant 0 : index
    %c0_2 = arith.constant 0 : index
    %1 = vector.load %arg2[%c0_1, %c0_2] : memref<128x128xf32, #tpu.memory_space<vmem>>, vector<128x128xf32>
    %cst = arith.constant dense<0.000000e+00> : vector<8x128xf32>
    %2 = tpu.matmul %0, %1, %cst {dimension_numbers = #tpu.dot_dimension_numbers<[1], [0], [0], [1], [0, 0, 1, 1], [], []>} : vector<8x128xf32>, vector<128x128xf32>, vector<8x128xf32> -> vector<8x128xf32>
    %c0_3 = arith.constant 0 : index
    %c0_4 = arith.constant 0 : index
    %3 = vector.load %arg3[%c0_3, %c0_4] : memref<1x128xf32, #tpu.memory_space<vmem>>, vector<1x128xf32>
    %4 = vector.broadcast %3 : vector<1x128xf32> to vector<8x128xf32>
    %5 = arith.addf %2, %4 : vector<8x128xf32>
    %cst_5 = arith.constant 0.000000e+00 : f32
    %6 = vector.broadcast %cst_5 : f32 to vector<8x128xf32>
    %7 = arith.maximumf %5, %6 : vector<8x128xf32>
    %c0_6 = arith.constant 0 : index
    %c0_7 = arith.constant 0 : index
    %8 = vector.load %arg4[%c0_6, %c0_7] : memref<128x128xf32, #tpu.memory_space<vmem>>, vector<128x128xf32>
    %cst_8 = arith.constant dense<0.000000e+00> : vector<8x128xf32>
    %9 = tpu.matmul %7, %8, %cst_8 {dimension_numbers = #tpu.dot_dimension_numbers<[1], [0], [0], [1], [0, 0, 1, 1], [], []>} : vector<8x128xf32>, vector<128x128xf32>, vector<8x128xf32> -> vector<8x128xf32>
    %c0_9 = arith.constant 0 : index
    %c0_10 = arith.constant 0 : index
    %10 = vector.load %arg5[%c0_9, %c0_10] : memref<1x128xf32, #tpu.memory_space<vmem>>, vector<1x128xf32>
    %11 = vector.broadcast %10 : vector<1x128xf32> to vector<8x128xf32>
    %12 = arith.addf %9, %11 : vector<8x128xf32>
    %c0_11 = arith.constant 0 : index
    %c0_12 = arith.constant 0 : index
    %13 = vector.load %arg6[%c0_11, %c0_12] : memref<8x128xf32, #tpu.memory_space<vmem>>, vector<8x128xf32>
    tpu.vector_store %arg6[%c0_11, %c0_12], %12 {strides = array<i32>} : memref<8x128xf32, #tpu.memory_space<vmem>>, vector<8x128xf32>,
    return
  }
  func.func @transform_0(%arg0: i32) -> (i32, i32) {
    %c0_i32 = arith.constant 0 : i32
    %c0_i32_0 = arith.constant 0 : i32
    return %arg0, %c0_i32 : i32, i32
  }
  func.func @transform_1(%arg0: i32) -> (i32, i32) {
    %c0_i32 = arith.constant 0 : i32
    %c0_i32_0 = arith.constant 0 : i32
    %c0_i32_1 = arith.constant 0 : i32
    return %c0_i32, %c0_i32_0 : i32, i32
  }
  func.func @transform_2(%arg0: i32) -> (i32, i32) {
    %c0_i32 = arith.constant 0 : i32
    %c0_i32_0 = arith.constant 0 : i32
    %c0_i32_1 = arith.constant 0 : i32
    return %c0_i32, %c0_i32_0 : i32, i32
  }
  func.func @transform_3(%arg0: i32) -> (i32, i32) {
    %c0_i32 = arith.constant 0 : i32
    %c0_i32_0 = arith.constant 0 : i32
    %c0_i32_1 = arith.constant 0 : i32
    return %c0_i32, %c0_i32_0 : i32, i32
  }
  func.func @transform_4(%arg0: i32) -> (i32, i32) {
    %c0_i32 = arith.constant 0 : i32
    %c0_i32_0 = arith.constant 0 : i32
    %c0_i32_1 = arith.constant 0 : i32
    return %c0_i32, %c0_i32_0 : i32, i32
  }
  func.func @transform_5(%arg0: i32) -> (i32, i32) {
    %c0_i32 = arith.constant 0 : i32
    %c0_i32_0 = arith.constant 0 : i32
    return %arg0, %c0_i32 : i32, i32
  }
}

</mosaic_0001>

<llo_original>
// kernel: encoder_forward.1
$region0: #{encoder_forward.1}
  #allocation0 [shape = 'u32[]', space=smem, size = 0x4, offset = 0x4, fixed_abs, tag = 'smem constant byte address 0x4 - core index']
  #allocation1 [shape = 'u32[72,128]{1,0:T(1,128)}', space=vmem, size = 0x9000, scoped, tag = 'internal scratch']
  %s0 = inlined_call_operand.vmem [shape: f32[8,128], index: 0, kind: input, shape index: {}]
  %s1 = inlined_call_operand.hbm [shape: f32[128,128], index: 1, kind: input, shape index: {}]
  %s2 = inlined_call_operand.vmem [shape: f32[1,128], index: 2, kind: input, shape index: {}]
  %s3 = inlined_call_operand.hbm [shape: f32[128,128], index: 3, kind: input, shape index: {}]
  %s4 = inlined_call_operand.vmem [shape: f32[1,128], index: 4, kind: input, shape index: {}]
  %s5 = inlined_call_operand.vmem [shape: f32[8,128], index: 5, kind: output, shape index: {}]
  %s6 = sld [smem:[#allocation0]]
  $region38: #{encoder_forward.1} parent=0
    _
  %s8 = ssub.s32 1, %s6
  %s9 = scalar_select 0, %s8, %s6
  $region1: #{encoder_forward.1} parent=0
    #allocation2 [shape = 'u8[65536]{0}', space=vmem, size = 0x10000, scoped, tag = 'input window, operand 1, single buffered']
    #allocation3 [shape = 's32[1]{0}', space=sflag, size = 0x4, scoped, tag = 'scoped memory for encoder_forward.1']
    #allocation4 [shape = 'u8[65536]{0}', space=vmem, size = 0x10000, scoped, tag = 'input window, operand 3, single buffered']
    #allocation5 [shape = 's32[1]{0}', space=sflag, size = 0x4, scoped, tag = 'scoped memory for encoder_forward.1']
    %10 = vsyncpa [#allocation3], 0
    %11 = vsyncpa [#allocation5], 0
    // Predicated region
    $region2: #{encoder_forward.1} parent=1 // pred_check
      _
    $region3: #{encoder_forward.1} parent=1 // pred_check_branch
      %13 = sbr.rel (0) target = $region5
    $region4: #{encoder_forward.1} parent=1 // pred_region
      _
    $region5: #{encoder_forward.1} parent=1 // pred_fallthru
      _
    // Predicated region
    $region6: #{encoder_forward.1} parent=1 // pred_check
      _
    $region7: #{encoder_forward.1} parent=1 // pred_check_branch
      %15 = sbr.rel (0) target = $region9
    $region8: #{encoder_forward.1} parent=1 // pred_region
      %17 = vsyncadd [#allocation3], 0
      %s18 = sshll.u32 %s1, 4
      %s19 = int_to_ptr.hbm [resolvable:$true] %s18
      %s20 = sshll.u32 [#allocation2], 4
      %s21 = int_to_ptr.vmem [resolvable:$true] %s20
      %26 = dma.hbm_to_vmem [thread:$0]  %s19, 2048, %s21, [#allocation3], 128, 128, 8
    $region9: #{encoder_forward.1} parent=1 // pred_fallthru
      _
    // Predicated region
    $region10: #{encoder_forward.1} parent=1 // pred_check
      _
    $region11: #{encoder_forward.1} parent=1 // pred_check_branch
      %28 = sbr.rel (0) target = $region13
    $region12: #{encoder_forward.1} parent=1 // pred_region
      _
    $region13: #{encoder_forward.1} parent=1 // pred_fallthru
      _
    // Predicated region
    $region14: #{encoder_forward.1} parent=1 // pred_check
      _
    $region15: #{encoder_forward.1} parent=1 // pred_check_branch
      %30 = sbr.rel (0) target = $region17
    $region16: #{encoder_forward.1} parent=1 // pred_region
      %32 = vsyncadd [#allocation5], 0
      %s33 = sshll.u32 %s3, 4
      %s34 = int_to_ptr.hbm [resolvable:$true] %s33
      %s35 = sshll.u32 [#allocation4], 4
      %s36 = int_to_ptr.vmem [resolvable:$true] %s35
      %41 = dma.hbm_to_vmem [thread:$0]  %s34, 2048, %s36, [#allocation5], 128, 128, 8
    $region17: #{encoder_forward.1} parent=1 // pred_fallthru
      _
    // Predicated region
    $region18: #{encoder_forward.1} parent=1 // pred_check
      _
    $region19: #{encoder_forward.1} parent=1 // pred_check_branch
      %43 = sbr.rel (0) target = $region21
    $region20: #{encoder_forward.1} parent=1 // pred_region
      _
    $region21: #{encoder_forward.1} parent=1 // pred_fallthru
      _
    // Predicated region
    $region22: #{encoder_forward.1} parent=1 // pred_check
      _
    $region23: #{encoder_forward.1} parent=1 // pred_check_branch
      %45 = sbr.rel (0) target = $region25
    $region24: #{encoder_forward.1} parent=1 // pred_region
      %47 = dma.done [#allocation3], 2048
    $region25: #{encoder_forward.1} parent=1 // pred_fallthru
      _
    // Predicated region
    $region26: #{encoder_forward.1} parent=1 // pred_check
      _
    $region27: #{encoder_forward.1} parent=1 // pred_check_branch
      %49 = sbr.rel (0) target = $region29
    $region28: #{encoder_forward.1} parent=1 // pred_region
      %51 = dma.done [#allocation5], 2048
    $region29: #{encoder_forward.1} parent=1 // pred_fallthru
      _
    %v52 = vld [vmem:[%s0] sm:$0xff]
    %v53 = vld [vmem:[#allocation2] sm:$0xff]
    %v54 = vld [vmem:[#allocation2 + $0x8] sm:$0xff]
    %v55 = vld [vmem:[#allocation2 + $0x10] sm:$0xff]
    %v56 = vld [vmem:[#allocation2 + $0x18] sm:$0xff]
    %v57 = vld [vmem:[#allocation2 + $0x20] sm:$0xff]
    %v58 = vld [vmem:[#allocation2 + $0x28] sm:$0xff]
    %v59 = vld [vmem:[#allocation2 + $0x30] sm:$0xff]
    %v60 = vld [vmem:[#allocation2 + $0x38] sm:$0xff]
    %v61 = vld [vmem:[#allocation2 + $0x40] sm:$0xff]
    %v62 = vld [vmem:[#allocation2 + $0x48] sm:$0xff]
    %v63 = vld [vmem:[#allocation2 + $0x50] sm:$0xff]
    %v64 = vld [vmem:[#allocation2 + $0x58] sm:$0xff]
    %v65 = vld [vmem:[#allocation2 + $0x60] sm:$0xff]
    %v66 = vld [vmem:[#allocation2 + $0x68] sm:$0xff]
    %v67 = vld [vmem:[#allocation2 + $0x70] sm:$0xff]
    %v68 = vld [vmem:[#allocation2 + $0x78] sm:$0xff]
    %v69 = vld [vmem:[%s2] sm:$0x1]
    %v71 = vperm.slane %v69, 0
    %73 = vmatpush.msra.mxu0 %v68
    %74 = vmatpush.msra.mxu0 %v67
    %75 = vmatpush.msra.mxu0 %v66
    %76 = vmatpush.msra.mxu0 %v65
    %77 = vmatpush.msra.mxu0 %v64
    %78 = vmatpush.msra.mxu0 %v63
    %79 = vmatpush.msra.mxu0 %v62
    %80 = vmatpush.msra.mxu0 %v61
    %81 = vmatpush.msra.mxu0 %v60
    %82 = vmatpush.msra.mxu0 %v59
    %83 = vmatpush.msra.mxu0 %v58
    %84 = vmatpush.msra.mxu0 %v57
    %85 = vmatpush.msra.mxu0 %v56
    %86 = vmatpush.msra.mxu0 %v55
    %87 = vmatpush.msra.mxu0 %v54
    %88 = vmatpush.msra.mxu0 %v53
    %89 = vmatmul.f32.gmra.mxu0 %v52
    %v90 = vpop.f32.mrf.mxu0
    %v91 = vadd.f32 %v71, %v90
    %92 = vdwg.mxu0
    %v93 = vmax.f32 %v91, 0.0
    %v94 = vld [vmem:[#allocation4] sm:$0xff]
    %v95 = vld [vmem:[#allocation4 + $0x8] sm:$0xff]
    %v96 = vld [vmem:[#allocation4 + $0x10] sm:$0xff]
    %v97 = vld [vmem:[#allocation4 + $0x18] sm:$0xff]
    %v98 = vld [vmem:[#allocation4 + $0x20] sm:$0xff]
    %v99 = vld [vmem:[#allocation4 + $0x28] sm:$0xff]
    %v100 = vld [vmem:[#allocation4 + $0x30] sm:$0xff]
    %v101 = vld [vmem:[#allocation4 + $0x38] sm:$0xff]
    %v102 = vld [vmem:[#allocation4 + $0x40] sm:$0xff]
    %v103 = vld [vmem:[#allocation4 + $0x48] sm:$0xff]
    %v104 = vld [vmem:[#allocation4 + $0x50] sm:$0xff]
    %v105 = vld [vmem:[#allocation4 + $0x58] sm:$0xff]
    %v106 = vld [vmem:[#allocation4 + $0x60] sm:$0xff]
    %v107 = vld [vmem:[#allocation4 + $0x68] sm:$0xff]
    %v108 = vld [vmem:[#allocation4 + $0x70] sm:$0xff]
    %v109 = vld [vmem:[#allocation4 + $0x78] sm:$0xff]
    %v110 = vld [vmem:[%s4] sm:$0x1]
    %v112 = vperm.slane %v110, 0
    %114 = vmatpush.msra.mxu0 %v109
    %115 = vmatpush.msra.mxu0 %v108
    %116 = vmatpush.msra.mxu0 %v107
    %117 = vmatpush.msra.mxu0 %v106
    %118 = vmatpush.msra.mxu0 %v105
    %119 = vmatpush.msra.mxu0 %v104
    %120 = vmatpush.msra.mxu0 %v103
    %121 = vmatpush.msra.mxu0 %v102
    %122 = vmatpush.msra.mxu0 %v101
    %123 = vmatpush.msra.mxu0 %v100
    %124 = vmatpush.msra.mxu0 %v99
    %125 = vmatpush.msra.mxu0 %v98
    %126 = vmatpush.msra.mxu0 %v97
    %127 = vmatpush.msra.mxu0 %v96
    %128 = vmatpush.msra.mxu0 %v95
    %129 = vmatpush.msra.mxu0 %v94
    %130 = vmatmul.f32.gmra.mxu0 %v93
    %v131 = vpop.f32.mrf.mxu0
    %v132 = vadd.f32 %v112, %v131
    %133 = vdwg.mxu0
    %134 = vst [vmem:[%s5] sm:$0xff] %v132
    // Predicated region
    $region30: #{encoder_forward.1} parent=1 // pred_check
      _
    $region31: #{encoder_forward.1} parent=1 // pred_check_branch
      %136 = sbr.rel (0) target = $region33
    $region32: #{encoder_forward.1} parent=1 // pred_region
      _
    $region33: #{encoder_forward.1} parent=1 // pred_fallthru
      _
    // Predicated region
    $region34: #{encoder_forward.1} parent=1 // pred_check
      _
    $region35: #{encoder_forward.1} parent=1 // pred_check_branch
      %138 = sbr.rel (0) target = $region37
    $region36: #{encoder_forward.1} parent=1 // pred_region
      _
    $region37: #{encoder_forward.1} parent=1 // pred_fallthru
      _
    %139 = vsyncpa [#allocation3], 1
    %140 = vsyncpa [#allocation5], 1

</llo_original>
